<compile_context>
chip_gen: v6e
topology: v6e:2x2x1
jax: 0.10.0
libtpu: 0.0.40
codegen_flags: <defaults>
</compile_context>

<pallas_src>
import functools

import numpy as np
import jax
import jax.numpy as jnp
from jax.experimental import pallas as pl
from jax.experimental.pallas import tpu as pltpu


def normcnn_kernel(x_ref, w_ref, mask_ref, gamma_ref, beta_ref, o_ref, src_ref,
                   *, taps, W, HW, pad, eps):
    # x_ref:     (Cin, pad + N*H*W + pad)  pre-padded lane-dense f32 slab
    # w_ref:     (Cout, T*Cin)             stacked block-diagonal grouped-conv weight
    # mask_ref:  (T, Cin, N*H*W)           per-tap validity masks (pre-broadcast over Cin)
    # gamma_ref, beta_ref: (Cout, 1)       f32
    # o_ref:     (N, Cout, H*W)
    # src_ref:   (T*Cin, N*H*W)            VMEM scratch for the stacked shifted operand
    Cin = x_ref.shape[0]
    N, Cout, _ = o_ref.shape
    NHW = N * HW

    # Stage the stacked (T*Cin, NHW) operand: one lane-shifted (and, off-center,
    # boundary-masked) (Cin, NHW) block per tap, written straight into VMEM scratch.
    for t, (dh, dw) in enumerate(taps):
        s = dh * W + dw
        src = x_ref[:, pad + s: pad + s + NHW]
        if dh != 0 or dw != 0:               # center tap mask is all-ones -> skip the mul
            src = src * mask_ref[t]
        src_ref[t * Cin:(t + 1) * Cin, :] = src

    # Grouped 3x3 conv as ONE MXU matmul: (Cout, T*Cin) @ (T*Cin, NHW) -> (Cout, NHW).
    acc = jnp.dot(w_ref[...], src_ref[...], preferred_element_type=jnp.float32)

    # BatchNorm2d training-mode batch statistics (biased variance), centered two-pass,
    # with gamma/beta folded into a single per-channel scale & shift.
    inv_n = 1.0 / float(NHW)
    mean = jnp.sum(acc, axis=1, keepdims=True) * inv_n          # (Cout, 1)
    cen = acc - mean
    var = jnp.sum(cen * cen, axis=1, keepdims=True) * inv_n     # (Cout, 1)
    scale = gamma_ref[...] * jax.lax.rsqrt(var + eps)
    yn = cen * scale + beta_ref[...]

    # SiLU
    act = yn * jax.nn.sigmoid(yn)

    for n in range(N):
        o_ref[n] = act[:, n * HW:(n + 1) * HW].astype(o_ref.dtype)


def normcnn_forward(x_nchw, w_oihw, gamma, beta, groups=4, eps=1e-5):
    """x_nchw: (N, Cin, H, W); w_oihw: (Cout, Cin/groups, 3, 3) (PyTorch layouts)."""
    N, Cin, H, W = x_nchw.shape
    Cout, Cin_g, KH, KW = w_oihw.shape
    assert Cin % groups == 0 and Cout % groups == 0 and Cin // groups == Cin_g
    assert KH == 3 and KW == 3, "module hard-codes padding=1, i.e. a 3x3 'same' conv"
    Cout_g = Cout // groups
    HW = H * W
    NHW = N * HW
    T = KH * KW

    taps = tuple((kh - KH // 2, kw - KW // 2) for kh in range(KH) for kw in range(KW))

    # Lane-dense, pre-padded (Cin, pad + N*H*W + pad) f32 slab (wrapper-side layout
    # plumbing; ~24 KiB, negligible and fusable by XLA).
    max_shift = (KH // 2) * W + (KW // 2)
    pad = ((max_shift + 127) // 128) * 128
    x_slab = jnp.pad(
        jnp.transpose(x_nchw, (1, 0, 2, 3)).reshape(Cin, NHW).astype(jnp.float32),
        ((0, 0), (pad, pad)))

    # Stacked block-diagonal grouped-conv weight: (Cout, T*Cin),
    # w_stacked[o, t*Cin + c] = w[o, c - group_base(o), kh_t, kw_t] (0 outside the group).
    w_taps = jnp.transpose(w_oihw, (2, 3, 0, 1)).reshape(T, Cout, Cin_g).astype(jnp.float32)
    src_c = (np.arange(Cout)[:, None] // Cout_g) * Cin_g + np.arange(Cin_g)[None, :]
    scatter = jnp.asarray(
        (src_c[:, :, None] == np.arange(Cin)[None, None, :]).astype(np.float32))
    wblk = jnp.einsum('toi,oic->toc', w_taps, scatter)                  # (T, Cout, Cin)
    w_stacked = jnp.transpose(wblk, (1, 0, 2)).reshape(Cout, T * Cin)   # (Cout, T*Cin)

    # Per-tap validity masks over the flattened spatial axis, pre-broadcast over channels
    # so the kernel never emits a sublane broadcast: (T, Cin, N*H*W), ~144 KiB.
    hh = np.arange(H)[:, None]
    ww = np.arange(W)[None, :]
    base = np.stack([((hh + dh >= 0) & (hh + dh < H) & (ww + dw >= 0) & (ww + dw < W))
                     for (dh, dw) in taps]).astype(np.float32)           # (T, H, W)
    mask_flat = np.tile(base.reshape(T, 1, HW), (1, N, 1)).reshape(T, NHW)
    masks = jnp.asarray(np.ascontiguousarray(
        np.broadcast_to(mask_flat[:, None, :], (T, Cin, NHW))))

    kernel = functools.partial(normcnn_kernel, taps=taps, W=W, HW=HW, pad=pad, eps=eps)

    flops = 2 * Cout * (T * Cin) * NHW + 12 * Cout * NHW
    bytes_accessed = 4 * (x_slab.size + w_stacked.size + masks.size + 2 * Cout) \
        + N * Cout * HW * x_nchw.dtype.itemsize
    cost = pl.CostEstimate(flops=flops, transcendentals=Cout * NHW,
                           bytes_accessed=bytes_accessed)

    # TODO(synk): for large N*H*W, block the flattened spatial axis with a grid (mark it
    # "parallel" for v7x megacore), accumulate per-block sum/sumsq for a batch-global
    # two-pass BN finalize, and size blocks / vmem_limit_bytes for v7x's 64 MiB VMEM.
    out_flat = pl.pallas_call(
        kernel,
        out_shape=jax.ShapeDtypeStruct((N, Cout, HW), x_nchw.dtype),
        scratch_shapes=[pltpu.VMEM((T * Cin, NHW), jnp.float32)],
        cost_estimate=cost,
    )(x_slab, w_stacked, masks,
      gamma.reshape(Cout, 1).astype(jnp.float32),
      beta.reshape(Cout, 1).astype(jnp.float32))

    return out_flat.reshape(N, Cout, H, W)


def _reference(x_nchw, w_oihw, gamma, beta, groups=4):
    """Pure-JAX reference with identical semantics."""
    x = jnp.transpose(x_nchw, (0, 2, 3, 1)).astype(jnp.float32)
    w = jnp.transpose(w_oihw, (2, 3, 1, 0)).astype(jnp.float32)
    conv = jax.lax.conv_general_dilated(
        x, w, window_strides=(1, 1), padding=((1, 1), (1, 1)),
        dimension_numbers=("NHWC", "HWIO", "NHWC"),
        feature_group_count=groups)
    mean = jnp.mean(conv, axis=(0, 1, 2), keepdims=True)
    var = jnp.mean((conv - mean) ** 2, axis=(0, 1, 2), keepdims=True)
    yn = (conv - mean) * jax.lax.rsqrt(var + 1e-5) * gamma + beta
    act = yn * jax.nn.sigmoid(yn)
    return jnp.transpose(act, (0, 3, 1, 2))


if __name__ == "__main__":
    # NormCNN(inp=8, oup=8, kernal_size=3, stride=1, groups=4)
    N, Cin, Cout, H, W, groups = 2, 8, 8, 16, 16, 4

    key = jax.random.PRNGKey(0)
    kx, kw, kg, kb = jax.random.split(key, 4)
    x = jax.random.normal(kx, (N, Cin, H, W), dtype=jnp.float32)
    w = 0.1 * jax.random.normal(kw, (Cout, Cin // groups, 3, 3), dtype=jnp.float32)
    gamma = 1.0 + 0.1 * jax.random.normal(kg, (Cout,), dtype=jnp.float32)
    beta = 0.1 * jax.random.normal(kb, (Cout,), dtype=jnp.float32)

    out = jax.block_until_ready(normcnn_forward(x, w, gamma, beta, groups=groups))
    ref = jax.block_until_ready(_reference(x, w, gamma, beta, groups=groups))

    assert out.shape == (N, Cout, H, W)
    assert jnp.allclose(out, ref, atol=1e-4, rtol=1e-4), "mismatch vs reference"

    print("KERNEL_OK")
</pallas_src>

<mosaic_0001>
module attributes {stable_mosaic.version = 11 : i64} {
  func.func @normcnn_kernel(%arg0: memref<8x768xf32, #tpu.memory_space<vmem>>, %arg1: memref<8x72xf32, #tpu.memory_space<vmem>>, %arg2: memref<9x8x512xf32, #tpu.memory_space<vmem>>, %arg3: memref<8x1xf32, #tpu.memory_space<vmem>>, %arg4: memref<8x1xf32, #tpu.memory_space<vmem>>, %arg5: memref<2x8x256xf32, #tpu.memory_space<vmem>>, %arg6: memref<72x512xf32, #tpu.memory_space<vmem>>) attributes {dimension_semantics = [], scalar_prefetch = 0 : i64, scratch_operands = 1 : i64, tpu.core_type = #tpu.core_type<tc>} {
    %c0 = arith.constant 0 : index
    %c111 = arith.constant 111 : index
    %0 = vector.load %arg0[%c0, %c111] : memref<8x768xf32, #tpu.memory_space<vmem>>, vector<8x512xf32>
    %c0_0 = arith.constant 0 : index
    %c0_1 = arith.constant 0 : index
    %c0_2 = arith.constant 0 : index
    %1 = vector.load %arg2[%c0_0, %c0_1, %c0_2] : memref<9x8x512xf32, #tpu.memory_space<vmem>>, vector<1x8x512xf32>
    %2 = vector.shape_cast %1 : vector<1x8x512xf32> to vector<8x512xf32>
    %3 = arith.mulf %0, %2 : vector<8x512xf32>
    %c0_3 = arith.constant 0 : index
    %c0_4 = arith.constant 0 : index
    %4 = vector.load %arg6[%c0_3, %c0_4] : memref<72x512xf32, #tpu.memory_space<vmem>>, vector<8x512xf32>
    tpu.vector_store %arg6[%c0_3, %c0_4], %3 {strides = array<i32>} : memref<72x512xf32, #tpu.memory_space<vmem>>, vector<8x512xf32>,
    %c0_5 = arith.constant 0 : index
    %c112 = arith.constant 112 : index
    %5 = vector.load %arg0[%c0_5, %c112] : memref<8x768xf32, #tpu.memory_space<vmem>>, vector<8x512xf32>
    %c1 = arith.constant 1 : index
    %c0_6 = arith.constant 0 : index
    %c0_7 = arith.constant 0 : index
    %6 = vector.load %arg2[%c1, %c0_6, %c0_7] : memref<9x8x512xf32, #tpu.memory_space<vmem>>, vector<1x8x512xf32>
    %7 = vector.shape_cast %6 : vector<1x8x512xf32> to vector<8x512xf32>
    %8 = arith.mulf %5, %7 : vector<8x512xf32>
    %c8 = arith.constant 8 : index
    %c0_8 = arith.constant 0 : index
    %9 = vector.load %arg6[%c8, %c0_8] : memref<72x512xf32, #tpu.memory_space<vmem>>, vector<8x512xf32>
    tpu.vector_store %arg6[%c8, %c0_8], %8 {strides = array<i32>} : memref<72x512xf32, #tpu.memory_space<vmem>>, vector<8x512xf32>,
    %c0_9 = arith.constant 0 : index
    %c113 = arith.constant 113 : index
    %10 = vector.load %arg0[%c0_9, %c113] : memref<8x768xf32, #tpu.memory_space<vmem>>, vector<8x512xf32>
    %c2 = arith.constant 2 : index
    %c0_10 = arith.constant 0 : index
    %c0_11 = arith.constant 0 : index
    %11 = vector.load %arg2[%c2, %c0_10, %c0_11] : memref<9x8x512xf32, #tpu.memory_space<vmem>>, vector<1x8x512xf32>
    %12 = vector.shape_cast %11 : vector<1x8x512xf32> to vector<8x512xf32>
    %13 = arith.mulf %10, %12 : vector<8x512xf32>
    %c16 = arith.constant 16 : index
    %c0_12 = arith.constant 0 : index
    %14 = vector.load %arg6[%c16, %c0_12] : memref<72x512xf32, #tpu.memory_space<vmem>>, vector<8x512xf32>
    tpu.vector_store %arg6[%c16, %c0_12], %13 {strides = array<i32>} : memref<72x512xf32, #tpu.memory_space<vmem>>, vector<8x512xf32>,
    %c0_13 = arith.constant 0 : index
    %c127 = arith.constant 127 : index
    %15 = vector.load %arg0[%c0_13, %c127] : memref<8x768xf32, #tpu.memory_space<vmem>>, vector<8x512xf32>
    %c3 = arith.constant 3 : index
    %c0_14 = arith.constant 0 : index
    %c0_15 = arith.constant 0 : index
    %16 = vector.load %arg2[%c3, %c0_14, %c0_15] : memref<9x8x512xf32, #tpu.memory_space<vmem>>, vector<1x8x512xf32>
    %17 = vector.shape_cast %16 : vector<1x8x512xf32> to vector<8x512xf32>
    %18 = arith.mulf %15, %17 : vector<8x512xf32>
    %c24 = arith.constant 24 : index
    %c0_16 = arith.constant 0 : index
    %19 = vector.load %arg6[%c24, %c0_16] : memref<72x512xf32, #tpu.memory_space<vmem>>, vector<8x512xf32>
    tpu.vector_store %arg6[%c24, %c0_16], %18 {strides = array<i32>} : memref<72x512xf32, #tpu.memory_space<vmem>>, vector<8x512xf32>,
    %c0_17 = arith.constant 0 : index
    %c128 = arith.constant 128 : index
    %20 = vector.load %arg0[%c0_17, %c128] : memref<8x768xf32, #tpu.memory_space<vmem>>, vector<8x512xf32>
    %c32 = arith.constant 32 : index
    %c0_18 = arith.constant 0 : index
    %21 = vector.load %arg6[%c32, %c0_18] : memref<72x512xf32, #tpu.memory_space<vmem>>, vector<8x512xf32>
    tpu.vector_store %arg6[%c32, %c0_18], %20 {strides = array<i32>} : memref<72x512xf32, #tpu.memory_space<vmem>>, vector<8x512xf32>,
    %c0_19 = arith.constant 0 : index
    %c129 = arith.constant 129 : index
    %22 = vector.load %arg0[%c0_19, %c129] : memref<8x768xf32, #tpu.memory_space<vmem>>, vector<8x512xf32>
    %c5 = arith.constant 5 : index
    %c0_20 = arith.constant 0 : index
    %c0_21 = arith.constant 0 : index
    %23 = vector.load %arg2[%c5, %c0_20, %c0_21] : memref<9x8x512xf32, #tpu.memory_space<vmem>>, vector<1x8x512xf32>
    %24 = vector.shape_cast %23 : vector<1x8x512xf32> to vector<8x512xf32>
    %25 = arith.mulf %22, %24 : vector<8x512xf32>
    %c40 = arith.constant 40 : index
    %c0_22 = arith.constant 0 : index
    %26 = vector.load %arg6[%c40, %c0_22] : memref<72x512xf32, #tpu.memory_space<vmem>>, vector<8x512xf32>
    tpu.vector_store %arg6[%c40, %c0_22], %25 {strides = array<i32>} : memref<72x512xf32, #tpu.memory_space<vmem>>, vector<8x512xf32>,
    %c0_23 = arith.constant 0 : index
    %c143 = arith.constant 143 : index
    %27 = vector.load %arg0[%c0_23, %c143] : memref<8x768xf32, #tpu.memory_space<vmem>>, vector<8x512xf32>
    %c6 = arith.constant 6 : index
    %c0_24 = arith.constant 0 : index
    %c0_25 = arith.constant 0 : index
    %28 = vector.load %arg2[%c6, %c0_24, %c0_25] : memref<9x8x512xf32, #tpu.memory_space<vmem>>, vector<1x8x512xf32>
    %29 = vector.shape_cast %28 : vector<1x8x512xf32> to vector<8x512xf32>
    %30 = arith.mulf %27, %29 : vector<8x512xf32>
    %c48 = arith.constant 48 : index
    %c0_26 = arith.constant 0 : index
    %31 = vector.load %arg6[%c48, %c0_26] : memref<72x512xf32, #tpu.memory_space<vmem>>, vector<8x512xf32>
    tpu.vector_store %arg6[%c48, %c0_26], %30 {strides = array<i32>} : memref<72x512xf32, #tpu.memory_space<vmem>>, vector<8x512xf32>,
    %c0_27 = arith.constant 0 : index
    %c144 = arith.constant 144 : index
    %32 = vector.load %arg0[%c0_27, %c144] : memref<8x768xf32, #tpu.memory_space<vmem>>, vector<8x512xf32>
    %c7 = arith.constant 7 : index
    %c0_28 = arith.constant 0 : index
    %c0_29 = arith.constant 0 : index
    %33 = vector.load %arg2[%c7, %c0_28, %c0_29] : memref<9x8x512xf32, #tpu.memory_space<vmem>>, vector<1x8x512xf32>
    %34 = vector.shape_cast %33 : vector<1x8x512xf32> to vector<8x512xf32>
    %35 = arith.mulf %32, %34 : vector<8x512xf32>
    %c56 = arith.constant 56 : index
    %c0_30 = arith.constant 0 : index
    %36 = vector.load %arg6[%c56, %c0_30] : memref<72x512xf32, #tpu.memory_space<vmem>>, vector<8x512xf32>
    tpu.vector_store %arg6[%c56, %c0_30], %35 {strides = array<i32>} : memref<72x512xf32, #tpu.memory_space<vmem>>, vector<8x512xf32>,
    %c0_31 = arith.constant 0 : index
    %c145 = arith.constant 145 : index
    %37 = vector.load %arg0[%c0_31, %c145] : memref<8x768xf32, #tpu.memory_space<vmem>>, vector<8x512xf32>
    %c8_32 = arith.constant 8 : index
    %c0_33 = arith.constant 0 : index
    %c0_34 = arith.constant 0 : index
    %38 = vector.load %arg2[%c8_32, %c0_33, %c0_34] : memref<9x8x512xf32, #tpu.memory_space<vmem>>, vector<1x8x512xf32>
    %39 = vector.shape_cast %38 : vector<1x8x512xf32> to vector<8x512xf32>
    %40 = arith.mulf %37, %39 : vector<8x512xf32>
    %c64 = arith.constant 64 : index
    %c0_35 = arith.constant 0 : index
    %41 = vector.load %arg6[%c64, %c0_35] : memref<72x512xf32, #tpu.memory_space<vmem>>, vector<8x512xf32>
    tpu.vector_store %arg6[%c64, %c0_35], %40 {strides = array<i32>} : memref<72x512xf32, #tpu.memory_space<vmem>>, vector<8x512xf32>,
    %c0_36 = arith.constant 0 : index
    %c0_37 = arith.constant 0 : index
    %42 = vector.load %arg1[%c0_36, %c0_37] : memref<8x72xf32, #tpu.memory_space<vmem>>, vector<8x72xf32>
    %c0_38 = arith.constant 0 : index
    %c0_39 = arith.constant 0 : index
    %43 = vector.load %arg6[%c0_38, %c0_39] : memref<72x512xf32, #tpu.memory_space<vmem>>, vector<72x512xf32>
    %cst = arith.constant dense<0.000000e+00> : vector<8x512xf32>
    %44 = tpu.matmul %42, %43, %cst {dimension_numbers = #tpu.dot_dimension_numbers<[1], [0], [0], [1], [0, 0, 1, 1], [], []>} : vector<8x72xf32>, vector<72x512xf32>, vector<8x512xf32> -> vector<8x512xf32>
    %cst_40 = arith.constant dense<0.000000e+00> : vector<8xf32>
    %45 = vector.multi_reduction <add>, %44, %cst_40 [1] : vector<8x512xf32> to vector<8xf32>
    %46 = vector.shape_cast %45 : vector<8xf32> to vector<8x1xf32>
    %cst_41 = arith.constant 0.001953125 : f32
    %47 = vector.broadcast %cst_41 : f32 to vector<8x1xf32>
    %48 = arith.mulf %46, %47 : vector<8x1xf32>
    %49 = vector.broadcast %48 : vector<8x1xf32> to vector<8x512xf32>
    %50 = arith.subf %44, %49 : vector<8x512xf32>
    %51 = arith.mulf %50, %50 : vector<8x512xf32>
    %cst_42 = arith.constant dense<0.000000e+00> : vector<8xf32>
    %52 = vector.multi_reduction <add>, %51, %cst_42 [1] : vector<8x512xf32> to vector<8xf32>
    %53 = vector.shape_cast %52 : vector<8xf32> to vector<8x1xf32>
    %cst_43 = arith.constant 0.001953125 : f32
    %54 = vector.broadcast %cst_43 : f32 to vector<8x1xf32>
    %55 = arith.mulf %53, %54 : vector<8x1xf32>
    %c0_44 = arith.constant 0 : index
    %c0_45 = arith.constant 0 : index
    %56 = vector.load %arg3[%c0_44, %c0_45] : memref<8x1xf32, #tpu.memory_space<vmem>>, vector<8x1xf32>
    %cst_46 = arith.constant 9.99999974E-6 : f32
    %57 = vector.broadcast %cst_46 : f32 to vector<8x1xf32>
    %58 = arith.addf %55, %57 : vector<8x1xf32>
    %59 = math.rsqrt %58 : vector<8x1xf32>
    %60 = arith.mulf %56, %59 : vector<8x1xf32>
    %61 = vector.broadcast %60 : vector<8x1xf32> to vector<8x512xf32>
    %62 = arith.mulf %50, %61 : vector<8x512xf32>
    %c0_47 = arith.constant 0 : index
    %c0_48 = arith.constant 0 : index
    %63 = vector.load %arg4[%c0_47, %c0_48] : memref<8x1xf32, #tpu.memory_space<vmem>>, vector<8x1xf32>
    %64 = vector.broadcast %63 : vector<8x1xf32> to vector<8x512xf32>
    %65 = arith.addf %62, %64 : vector<8x512xf32>
    %66 = arith.negf %65 : vector<8x512xf32>
    %67 = math.exp %66 : vector<8x512xf32>
    %cst_49 = arith.constant 1.000000e+00 : f32
    %68 = vector.broadcast %cst_49 : f32 to vector<8x512xf32>
    %69 = arith.addf %68, %67 : vector<8x512xf32>
    %70 = arith.divf %68, %69 : vector<8x512xf32>
    %71 = arith.mulf %65, %70 : vector<8x512xf32>
    %72 = vector.extract_strided_slice %71 {offsets = [0, 0], sizes = [8, 256], strides = [1, 1]} : vector<8x512xf32> to vector<8x256xf32>
    %c0_50 = arith.constant 0 : index
    %c0_51 = arith.constant 0 : index
    %c0_52 = arith.constant 0 : index
    %73 = vector.load %arg5[%c0_50, %c0_51, %c0_52] : memref<2x8x256xf32, #tpu.memory_space<vmem>>, vector<1x8x256xf32>
    %74 = vector.shape_cast %73 : vector<1x8x256xf32> to vector<8x256xf32>
    %75 = vector.shape_cast %72 : vector<8x256xf32> to vector<1x8x256xf32>
    tpu.vector_store %arg5[%c0_50, %c0_51, %c0_52], %75 {strides = array<i32>} : memref<2x8x256xf32, #tpu.memory_space<vmem>>, vector<1x8x256xf32>,
    %76 = vector.extract_strided_slice %71 {offsets = [0, 256], sizes = [8, 256], strides = [1, 1]} : vector<8x512xf32> to vector<8x256xf32>
    %c1_53 = arith.constant 1 : index
    %c0_54 = arith.constant 0 : index
    %c0_55 = arith.constant 0 : index
    %77 = vector.load %arg5[%c1_53, %c0_54, %c0_55] : memref<2x8x256xf32, #tpu.memory_space<vmem>>, vector<1x8x256xf32>
    %78 = vector.shape_cast %77 : vector<1x8x256xf32> to vector<8x256xf32>
    %79 = vector.shape_cast %76 : vector<8x256xf32> to vector<1x8x256xf32>
    tpu.vector_store %arg5[%c1_53, %c0_54, %c0_55], %79 {strides = array<i32>} : memref<2x8x256xf32, #tpu.memory_space<vmem>>, vector<1x8x256xf32>,
    return
  }
}

</mosaic_0001>

<llo_original>
// kernel: tpu_custom_call.1
$region0: #{tpu_custom_call.1}
  #allocation0 [shape = 'u32[]', space=smem, size = 0x4, offset = 0x4, fixed_abs, tag = 'smem constant byte address 0x4 - core index']
  #allocation1 [shape = 'u32[144,128]{1,0:T(1,128)}', space=vmem, size = 0x12000, scoped, tag = 'internal scratch']
  #allocation2 [shape = 'f32[72,512]{1,0:T(8,128)}', space=vmem, size = 0x24000, scoped, tag = 'scratch operand']
  %s0 = inlined_call_operand.hbm [shape: f32[8,768], index: 0, kind: input, shape index: {}]
  %s1 = inlined_call_operand.vmem [shape: f32[8,72], index: 1, kind: input, shape index: {}]
  %s2 = inlined_call_operand.hbm [shape: f32[9,8,512], index: 2, kind: input, shape index: {}]
  %s3 = inlined_call_operand.vmem [shape: f32[8,1], index: 3, kind: input, shape index: {}]
  %s4 = inlined_call_operand.vmem [shape: f32[8,1], index: 4, kind: input, shape index: {}]
  %s5 = inlined_call_operand.hbm [shape: f32[2,8,256], index: 5, kind: output, shape index: {}]
  %s6 = sld [smem:[#allocation0]]
  $region38: #{tpu_custom_call.1} parent=0
    _
  %s8 = ssub.s32 1, %s6
  %s9 = scalar_select 0, %s8, %s6
  $region1: #{tpu_custom_call.1} parent=0
    #allocation3 [shape = 'u8[24576]{0}', space=vmem, size = 0x6000, scoped, tag = 'input window, operand 0, single buffered']
    #allocation4 [shape = 's32[1]{0}', space=sflag, size = 0x4, scoped, tag = 'scoped memory for tpu_custom_call.1']
    #allocation5 [shape = 's32[1]{0}', space=sflag, size = 0x4, scoped, tag = 'scoped memory for tpu_custom_call.1']
    #allocation6 [shape = 'u8[147456]{0}', space=vmem, size = 0x24000, scoped, tag = 'input window, operand 2, single buffered']
    #allocation7 [shape = 's32[1]{0}', space=sflag, size = 0x4, scoped, tag = 'scoped memory for tpu_custom_call.1']
    #allocation8 [shape = 'u8[16384]{0}', space=vmem, size = 0x4000, scoped, tag = 'output window, operand 0, single buffered']
    %10 = vsyncpa [#allocation4], 0
    %11 = vsyncpa [#allocation7], 0
    %12 = vsyncpa [#allocation5], 0
    // Predicated region
    $region2: #{tpu_custom_call.1} parent=1 // pred_check
      _
    $region3: #{tpu_custom_call.1} parent=1 // pred_check_branch
      %14 = sbr.rel (0) target = $region5
    $region4: #{tpu_custom_call.1} parent=1 // pred_region
      %s16 = ssub.s32 768, 768
      %17 = vsyncadd [#allocation4], %s16
      %s19 = sshll.u32 [#allocation3], 4
      %s20 = int_to_ptr.vmem [resolvable:$true] %s19
      %22 = dma.hbm_to_vmem [thread:$0]  %s0, 768, %s20, [#allocation4]
    $region5: #{tpu_custom_call.1} parent=1 // pred_fallthru
      _
    // Predicated region
    $region6: #{tpu_custom_call.1} parent=1 // pred_check
      _
    $region7: #{tpu_custom_call.1} parent=1 // pred_check_branch
      %24 = sbr.rel (0) target = $region9
    $region8: #{tpu_custom_call.1} parent=1 // pred_region
      _
    $region9: #{tpu_custom_call.1} parent=1 // pred_fallthru
      _
    // Predicated region
    $region10: #{tpu_custom_call.1} parent=1 // pred_check
      _
    $region11: #{tpu_custom_call.1} parent=1 // pred_check_branch
      %26 = sbr.rel (0) target = $region13
    $region12: #{tpu_custom_call.1} parent=1 // pred_region
      %s28 = ssub.s32 4608, 4608
      %29 = vsyncadd [#allocation7], %s28
      %s30 = sshll.u32 [#allocation6], 4
      %s31 = int_to_ptr.vmem [resolvable:$true] %s30
      %36 = dma.hbm_to_vmem [thread:$0]  %s2, 4608, %s31, [#allocation7], 512, 512, 32
    $region13: #{tpu_custom_call.1} parent=1 // pred_fallthru
      _
    // Predicated region
    $region14: #{tpu_custom_call.1} parent=1 // pred_check
      _
    $region15: #{tpu_custom_call.1} parent=1 // pred_check_branch
      %38 = sbr.rel (0) target = $region17
    $region16: #{tpu_custom_call.1} parent=1 // pred_region
      _
    $region17: #{tpu_custom_call.1} parent=1 // pred_fallthru
      _
    // Predicated region
    $region18: #{tpu_custom_call.1} parent=1 // pred_check
      _
    $region19: #{tpu_custom_call.1} parent=1 // pred_check_branch
      %40 = sbr.rel (0) target = $region21
    $region20: #{tpu_custom_call.1} parent=1 // pred_region
      _
    $region21: #{tpu_custom_call.1} parent=1 // pred_fallthru
      _
    // Predicated region
    $region22: #{tpu_custom_call.1} parent=1 // pred_check
      _
    $region23: #{tpu_custom_call.1} parent=1 // pred_check_branch
      %42 = sbr.rel (0) target = $region25
    $region24: #{tpu_custom_call.1} parent=1 // pred_region
      %43 = dma.done [#allocation4], 768
    $region25: #{tpu_custom_call.1} parent=1 // pred_fallthru
      _
    // Predicated region
    $region26: #{tpu_custom_call.1} parent=1 // pred_check
      _
    $region27: #{tpu_custom_call.1} parent=1 // pred_check_branch
      %45 = sbr.rel (0) target = $region29
    $region28: #{tpu_custom_call.1} parent=1 // pred_region
      %46 = dma.done [#allocation7], 4608
    $region29: #{tpu_custom_call.1} parent=1 // pred_fallthru
      _
    %v47 = vld [vmem:[#allocation3] sm:$0xff]
    %v48 = vld [vmem:[#allocation3 + $0x8] sm:$0xff]
    %v49 = vld [vmem:[#allocation3 + $0x10] sm:$0xff]
    %v50 = vld [vmem:[#allocation3 + $0x18] sm:$0xff]
    %v51 = vld [vmem:[#allocation3 + $0x20] sm:$0xff]
    %v52 = vld [vmem:[#allocation6] sm:$0xff]
    %v53 = vld [vmem:[#allocation6 + $0x8] sm:$0xff]
    %v54 = vld [vmem:[#allocation6 + $0x10] sm:$0xff]
    %v55 = vld [vmem:[#allocation6 + $0x18] sm:$0xff]
    %60 = vrot.lane.b32.xlu0 %v52, 111
    %v61 = vpop.permute.xlu0 %60
    %62 = vrot.lane.b32.xlu0 %v53, 111
    %v63 = vpop.permute.xlu0 %62
    %64 = vrot.lane.b32.xlu0 %v54, 111
    %v65 = vpop.permute.xlu0 %64
    %66 = vrot.lane.b32.xlu0 %v55, 111
    %v67 = vpop.permute.xlu0 %66
    %vm68 = vcmask 908288
    %v69 = vsel %vm68, %v61, %v63
    %v70 = vsel %vm68, %v63, %v65
    %v71 = vsel %vm68, %v65, %v67
    %v77 = vmul.f32 %v47, %v61
    %v78 = vmul.f32 %v48, %v69
    %v79 = vmul.f32 %v49, %v70
    %v80 = vmul.f32 %v50, %v71
    %v81 = vmul.f32 %v51, %v67
    %87 = vrot.lane.b32.xlu0 %v77, 17
    %v88 = vpop.permute.xlu0 %87
    %89 = vrot.lane.b32.xlu0 %v78, 17
    %v90 = vpop.permute.xlu0 %89
    %91 = vrot.lane.b32.xlu0 %v79, 17
    %v92 = vpop.permute.xlu0 %91
    %93 = vrot.lane.b32.xlu0 %v80, 17
    %v94 = vpop.permute.xlu0 %93
    %95 = vrot.lane.b32.xlu0 %v81, 17
    %v96 = vpop.permute.xlu0 %95
    %vm97 = vcmask 138240
    %v98 = vsel %vm97, %v88, %v90
    %v99 = vsel %vm97, %v90, %v92
    %v100 = vsel %vm97, %v92, %v94
    %v101 = vsel %vm97, %v94, %v96
    %106 = vst [vmem:[#allocation2] sm:$0xff] %v98
    %107 = vst [vmem:[#allocation2 + $0x8] sm:$0xff] %v99
    %108 = vst [vmem:[#allocation2 + $0x10] sm:$0xff] %v100
    %109 = vst [vmem:[#allocation2 + $0x18] sm:$0xff] %v101
    %v110 = vld [vmem:[#allocation3] sm:$0xff]
    %v111 = vld [vmem:[#allocation3 + $0x8] sm:$0xff]
    %v112 = vld [vmem:[#allocation3 + $0x10] sm:$0xff]
    %v113 = vld [vmem:[#allocation3 + $0x18] sm:$0xff]
    %v114 = vld [vmem:[#allocation3 + $0x20] sm:$0xff]
    %s115 = scalar_lea.vmem [#allocation6], 32
    %v116 = vld [vmem:[%s115] sm:$0xff]
    %v117 = vld [vmem:[%s115 + $0x8] sm:$0xff]
    %v118 = vld [vmem:[%s115 + $0x10] sm:$0xff]
    %v119 = vld [vmem:[%s115 + $0x18] sm:$0xff]
    %124 = vrot.lane.b32.xlu0 %v116, 112
    %v125 = vpop.permute.xlu0 %124
    %126 = vrot.lane.b32.xlu0 %v117, 112
    %v127 = vpop.permute.xlu0 %126
    %128 = vrot.lane.b32.xlu0 %v118, 112
    %v129 = vpop.permute.xlu0 %128
    %130 = vrot.lane.b32.xlu0 %v119, 112
    %v131 = vpop.permute.xlu0 %130
    %vm132 = vcmask 916480
    %v133 = vsel %vm132, %v125, %v127
    %v134 = vsel %vm132, %v127, %v129
    %v135 = vsel %vm132, %v129, %v131
    %v141 = vmul.f32 %v110, %v125
    %v142 = vmul.f32 %v111, %v133
    %v143 = vmul.f32 %v112, %v134
    %v144 = vmul.f32 %v113, %v135
    %v145 = vmul.f32 %v114, %v131
    %151 = vrot.lane.b32.xlu0 %v141, 16
    %v152 = vpop.permute.xlu0 %151
    %153 = vrot.lane.b32.xlu0 %v142, 16
    %v154 = vpop.permute.xlu0 %153
    %155 = vrot.lane.b32.xlu0 %v143, 16
    %v156 = vpop.permute.xlu0 %155
    %157 = vrot.lane.b32.xlu0 %v144, 16
    %v158 = vpop.permute.xlu0 %157
    %159 = vrot.lane.b32.xlu0 %v145, 16
    %v160 = vpop.permute.xlu0 %159
    %vm161 = vcmask 130048
    %v162 = vsel %vm161, %v152, %v154
    %v163 = vsel %vm161, %v154, %v156
    %v164 = vsel %vm161, %v156, %v158
    %v165 = vsel %vm161, %v158, %v160
    %170 = vst [vmem:[#allocation2 + $0x20] sm:$0xff] %v162
    %171 = vst [vmem:[#allocation2 + $0x28] sm:$0xff] %v163
    %172 = vst [vmem:[#allocation2 + $0x30] sm:$0xff] %v164
    %173 = vst [vmem:[#allocation2 + $0x38] sm:$0xff] %v165
    %v174 = vld [vmem:[#allocation3] sm:$0xff]
    %v175 = vld [vmem:[#allocation3 + $0x8] sm:$0xff]
    %v176 = vld [vmem:[#allocation3 + $0x10] sm:$0xff]
    %v177 = vld [vmem:[#allocation3 + $0x18] sm:$0xff]
    %v178 = vld [vmem:[#allocation3 + $0x20] sm:$0xff]
    %s179 = scalar_lea.vmem [#allocation6], 64
    %v180 = vld [vmem:[%s179] sm:$0xff]
    %v181 = vld [vmem:[%s179 + $0x8] sm:$0xff]
    %v182 = vld [vmem:[%s179 + $0x10] sm:$0xff]
    %v183 = vld [vmem:[%s179 + $0x18] sm:$0xff]
    %188 = vrot.lane.b32.xlu0 %v180, 113
    %v189 = vpop.permute.xlu0 %188
    %190 = vrot.lane.b32.xlu0 %v181, 113
    %v191 = vpop.permute.xlu0 %190
    %192 = vrot.lane.b32.xlu0 %v182, 113
    %v193 = vpop.permute.xlu0 %192
    %194 = vrot.lane.b32.xlu0 %v183, 113
    %v195 = vpop.permute.xlu0 %194
    %vm196 = vcmask 924672
    %v197 = vsel %vm196, %v189, %v191
    %v198 = vsel %vm196, %v191, %v193
    %v199 = vsel %vm196, %v193, %v195
    %v205 = vmul.f32 %v174, %v189
    %v206 = vmul.f32 %v175, %v197
    %v207 = vmul.f32 %v176, %v198
    %v208 = vmul.f32 %v177, %v199
    %v209 = vmul.f32 %v178, %v195
    %215 = vrot.lane.b32.xlu0 %v205, 15
    %v216 = vpop.permute.xlu0 %215
    %217 = vrot.lane.b32.xlu0 %v206, 15
    %v218 = vpop.permute.xlu0 %217
    %219 = vrot.lane.b32.xlu0 %v207, 15
    %v220 = vpop.permute.xlu0 %219
    %221 = vrot.lane.b32.xlu0 %v208, 15
    %v222 = vpop.permute.xlu0 %221
    %223 = vrot.lane.b32.xlu0 %v209, 15
    %v224 = vpop.permute.xlu0 %223
    %vm225 = vcmask 121856
    %v226 = vsel %vm225, %v216, %v218
    %v227 = vsel %vm225, %v218, %v220
    %v228 = vsel %vm225, %v220, %v222
    %v229 = vsel %vm225, %v222, %v224
    %234 = vst [vmem:[#allocation2 + $0x40] sm:$0xff] %v226
    %235 = vst [vmem:[#allocation2 + $0x48] sm:$0xff] %v227
    %236 = vst [vmem:[#allocation2 + $0x50] sm:$0xff] %v228
    %237 = vst [vmem:[#allocation2 + $0x58] sm:$0xff] %v229
    %v238 = vld [vmem:[#allocation3] sm:$0xff]
    %v239 = vld [vmem:[#allocation3 + $0x8] sm:$0xff]
    %v240 = vld [vmem:[#allocation3 + $0x10] sm:$0xff]
    %v241 = vld [vmem:[#allocation3 + $0x18] sm:$0xff]
    %v242 = vld [vmem:[#allocation3 + $0x20] sm:$0xff]
    %s243 = scalar_lea.vmem [#allocation6], 96
    %v244 = vld [vmem:[%s243] sm:$0xff]
    %v245 = vld [vmem:[%s243 + $0x8] sm:$0xff]
    %v246 = vld [vmem:[%s243 + $0x10] sm:$0xff]
    %v247 = vld [vmem:[%s243 + $0x18] sm:$0xff]
    %252 = vrot.lane.b32.xlu0 %v244, 127
    %v253 = vpop.permute.xlu0 %252
    %254 = vrot.lane.b32.xlu0 %v245, 127
    %v255 = vpop.permute.xlu0 %254
    %256 = vrot.lane.b32.xlu0 %v246, 127
    %v257 = vpop.permute.xlu0 %256
    %258 = vrot.lane.b32.xlu0 %v247, 127
    %v259 = vpop.permute.xlu0 %258
    %vm260 = vcmask 1039360
    %v261 = vsel %vm260, %v253, %v255
    %v262 = vsel %vm260, %v255, %v257
    %v263 = vsel %vm260, %v257, %v259
    %v269 = vmul.f32 %v238, %v253
    %v270 = vmul.f32 %v239, %v261
    %v271 = vmul.f32 %v240, %v262
    %v272 = vmul.f32 %v241, %v263
    %v273 = vmul.f32 %v242, %v259
    %279 = vrot.lane.b32.xlu0 %v269, 1
    %v280 = vpop.permute.xlu0 %279
    %281 = vrot.lane.b32.xlu0 %v270, 1
    %v282 = vpop.permute.xlu0 %281
    %283 = vrot.lane.b32.xlu0 %v271, 1
    %v284 = vpop.permute.xlu0 %283
    %285 = vrot.lane.b32.xlu0 %v272, 1
    %v286 = vpop.permute.xlu0 %285
    %287 = vrot.lane.b32.xlu0 %v273, 1
    %v288 = vpop.permute.xlu0 %287
    %vm289 = vcmask 7168
    %v290 = vsel %vm289, %v280, %v282
    %v291 = vsel %vm289, %v282, %v284
    %v292 = vsel %vm289, %v284, %v286
    %v293 = vsel %vm289, %v286, %v288
    %298 = vst [vmem:[#allocation2 + $0x60] sm:$0xff] %v290
    %299 = vst [vmem:[#allocation2 + $0x68] sm:$0xff] %v291
    %300 = vst [vmem:[#allocation2 + $0x70] sm:$0xff] %v292
    %301 = vst [vmem:[#allocation2 + $0x78] sm:$0xff] %v293
    %v302 = vld [vmem:[#allocation3 + $0x8] sm:$0xff]
    %v303 = vld [vmem:[#allocation3 + $0x10] sm:$0xff]
    %v304 = vld [vmem:[#allocation3 + $0x18] sm:$0xff]
    %v305 = vld [vmem:[#allocation3 + $0x20] sm:$0xff]
    %306 = vst [vmem:[#allocation2 + $0x80] sm:$0xff] %v302
    %307 = vst [vmem:[#allocation2 + $0x88] sm:$0xff] %v303
    %308 = vst [vmem:[#allocation2 + $0x90] sm:$0xff] %v304
    %309 = vst [vmem:[#allocation2 + $0x98] sm:$0xff] %v305
    %v310 = vld [vmem:[#allocation3 + $0x8] sm:$0xff]
    %v311 = vld [vmem:[#allocation3 + $0x10] sm:$0xff]
    %v312 = vld [vmem:[#allocation3 + $0x18] sm:$0xff]
    %v313 = vld [vmem:[#allocation3 + $0x20] sm:$0xff]
    %v314 = vld [vmem:[#allocation3 + $0x28] sm:$0xff]
    %s315 = scalar_lea.vmem [#allocation6], 160
    %v316 = vld [vmem:[%s315] sm:$0xff]
    %v317 = vld [vmem:[%s315 + $0x8] sm:$0xff]
    %v318 = vld [vmem:[%s315 + $0x10] sm:$0xff]
    %v319 = vld [vmem:[%s315 + $0x18] sm:$0xff]
    %324 = vrot.lane.b32.xlu0 %v316, 1
    %v325 = vpop.permute.xlu0 %324
    %326 = vrot.lane.b32.xlu0 %v317, 1
    %v327 = vpop.permute.xlu0 %326
    %328 = vrot.lane.b32.xlu0 %v318, 1
    %v329 = vpop.permute.xlu0 %328
    %330 = vrot.lane.b32.xlu0 %v319, 1
    %v331 = vpop.permute.xlu0 %330
    %v332 = vsel %vm289, %v325, %v327
    %v333 = vsel %vm289, %v327, %v329
    %v334 = vsel %vm289, %v329, %v331
    %v340 = vmul.f32 %v310, %v325
    %v341 = vmul.f32 %v311, %v332
    %v342 = vmul.f32 %v312, %v333
    %v343 = vmul.f32 %v313, %v334
    %v344 = vmul.f32 %v314, %v331
    %350 = vrot.lane.b32.xlu0 %v340, 127
    %v351 = vpop.permute.xlu0 %350
    %352 = vrot.lane.b32.xlu0 %v341, 127
    %v353 = vpop.permute.xlu0 %352
    %354 = vrot.lane.b32.xlu0 %v342, 127
    %v355 = vpop.permute.xlu0 %354
    %356 = vrot.lane.b32.xlu0 %v343, 127
    %v357 = vpop.permute.xlu0 %356
    %358 = vrot.lane.b32.xlu0 %v344, 127
    %v359 = vpop.permute.xlu0 %358
    %v360 = vsel %vm260, %v351, %v353
    %v361 = vsel %vm260, %v353, %v355
    %v362 = vsel %vm260, %v355, %v357
    %v363 = vsel %vm260, %v357, %v359
    %368 = vst [vmem:[#allocation2 + $0xa0] sm:$0xff] %v360
    %369 = vst [vmem:[#allocation2 + $0xa8] sm:$0xff] %v361
    %370 = vst [vmem:[#allocation2 + $0xb0] sm:$0xff] %v362
    %371 = vst [vmem:[#allocation2 + $0xb8] sm:$0xff] %v363
    %v372 = vld [vmem:[#allocation3 + $0x8] sm:$0xff]
    %v373 = vld [vmem:[#allocation3 + $0x10] sm:$0xff]
    %v374 = vld [vmem:[#allocation3 + $0x18] sm:$0xff]
    %v375 = vld [vmem:[#allocation3 + $0x20] sm:$0xff]
    %v376 = vld [vmem:[#allocation3 + $0x28] sm:$0xff]
    %s377 = scalar_lea.vmem [#allocation6], 192
    %v378 = vld [vmem:[%s377] sm:$0xff]
    %v379 = vld [vmem:[%s377 + $0x8] sm:$0xff]
    %v380 = vld [vmem:[%s377 + $0x10] sm:$0xff]
    %v381 = vld [vmem:[%s377 + $0x18] sm:$0xff]
    %386 = vrot.lane.b32.xlu0 %v378, 15
    %v387 = vpop.permute.xlu0 %386
    %388 = vrot.lane.b32.xlu0 %v379, 15
    %v389 = vpop.permute.xlu0 %388
    %390 = vrot.lane.b32.xlu0 %v380, 15
    %v391 = vpop.permute.xlu0 %390
    %392 = vrot.lane.b32.xlu0 %v381, 15
    %v393 = vpop.permute.xlu0 %392
    %v394 = vsel %vm225, %v387, %v389
    %v395 = vsel %vm225, %v389, %v391
    %v396 = vsel %vm225, %v391, %v393
    %v402 = vmul.f32 %v372, %v387
    %v403 = vmul.f32 %v373, %v394
    %v404 = vmul.f32 %v374, %v395
    %v405 = vmul.f32 %v375, %v396
    %v406 = vmul.f32 %v376, %v393
    %412 = vrot.lane.b32.xlu0 %v402, 113
    %v413 = vpop.permute.xlu0 %412
    %414 = vrot.lane.b32.xlu0 %v403, 113
    %v415 = vpop.permute.xlu0 %414
    %416 = vrot.lane.b32.xlu0 %v404, 113
    %v417 = vpop.permute.xlu0 %416
    %418 = vrot.lane.b32.xlu0 %v405, 113
    %v419 = vpop.permute.xlu0 %418
    %420 = vrot.lane.b32.xlu0 %v406, 113
    %v421 = vpop.permute.xlu0 %420
    %v422 = vsel %vm196, %v413, %v415
    %v423 = vsel %vm196, %v415, %v417
    %v424 = vsel %vm196, %v417, %v419
    %v425 = vsel %vm196, %v419, %v421
    %430 = vst [vmem:[#allocation2 + $0xc0] sm:$0xff] %v422
    %431 = vst [vmem:[#allocation2 + $0xc8] sm:$0xff] %v423
    %432 = vst [vmem:[#allocation2 + $0xd0] sm:$0xff] %v424
    %433 = vst [vmem:[#allocation2 + $0xd8] sm:$0xff] %v425
    %v434 = vld [vmem:[#allocation3 + $0x8] sm:$0xff]
    %v435 = vld [vmem:[#allocation3 + $0x10] sm:$0xff]
    %v436 = vld [vmem:[#allocation3 + $0x18] sm:$0xff]
    %v437 = vld [vmem:[#allocation3 + $0x20] sm:$0xff]
    %v438 = vld [vmem:[#allocation3 + $0x28] sm:$0xff]
    %s439 = scalar_lea.vmem [#allocation6], 224
    %v440 = vld [vmem:[%s439] sm:$0xff]
    %v441 = vld [vmem:[%s439 + $0x8] sm:$0xff]
    %v442 = vld [vmem:[%s439 + $0x10] sm:$0xff]
    %v443 = vld [vmem:[%s439 + $0x18] sm:$0xff]
    %448 = vrot.lane.b32.xlu0 %v440, 16
    %v449 = vpop.permute.xlu0 %448
    %450 = vrot.lane.b32.xlu0 %v441, 16
    %v451 = vpop.permute.xlu0 %450
    %452 = vrot.lane.b32.xlu0 %v442, 16
    %v453 = vpop.permute.xlu0 %452
    %454 = vrot.lane.b32.xlu0 %v443, 16
    %v455 = vpop.permute.xlu0 %454
    %v456 = vsel %vm161, %v449, %v451
    %v457 = vsel %vm161, %v451, %v453
    %v458 = vsel %vm161, %v453, %v455
    %v464 = vmul.f32 %v434, %v449
    %v465 = vmul.f32 %v435, %v456
    %v466 = vmul.f32 %v436, %v457
    %v467 = vmul.f32 %v437, %v458
    %v468 = vmul.f32 %v438, %v455
    %474 = vrot.lane.b32.xlu0 %v464, 112
    %v475 = vpop.permute.xlu0 %474
    %476 = vrot.lane.b32.xlu0 %v465, 112
    %v477 = vpop.permute.xlu0 %476
    %478 = vrot.lane.b32.xlu0 %v466, 112
    %v479 = vpop.permute.xlu0 %478
    %480 = vrot.lane.b32.xlu0 %v467, 112
    %v481 = vpop.permute.xlu0 %480
    %482 = vrot.lane.b32.xlu0 %v468, 112
    %v483 = vpop.permute.xlu0 %482
    %v484 = vsel %vm132, %v475, %v477
    %v485 = vsel %vm132, %v477, %v479
    %v486 = vsel %vm132, %v479, %v481
    %v487 = vsel %vm132, %v481, %v483
    %492 = vst [vmem:[#allocation2 + $0xe0] sm:$0xff] %v484
    %493 = vst [vmem:[#allocation2 + $0xe8] sm:$0xff] %v485
    %494 = vst [vmem:[#allocation2 + $0xf0] sm:$0xff] %v486
    %495 = vst [vmem:[#allocation2 + $0xf8] sm:$0xff] %v487
    %v496 = vld [vmem:[#allocation3 + $0x8] sm:$0xff]
    %v497 = vld [vmem:[#allocation3 + $0x10] sm:$0xff]
    %v498 = vld [vmem:[#allocation3 + $0x18] sm:$0xff]
    %v499 = vld [vmem:[#allocation3 + $0x20] sm:$0xff]
    %v500 = vld [vmem:[#allocation3 + $0x28] sm:$0xff]
    %s501 = scalar_lea.vmem [#allocation6], 256
    %v502 = vld [vmem:[%s501] sm:$0xff]
    %v503 = vld [vmem:[%s501 + $0x8] sm:$0xff]
    %v504 = vld [vmem:[%s501 + $0x10] sm:$0xff]
    %v505 = vld [vmem:[%s501 + $0x18] sm:$0xff]
    %510 = vrot.lane.b32.xlu0 %v502, 17
    %v511 = vpop.permute.xlu0 %510
    %512 = vrot.lane.b32.xlu0 %v503, 17
    %v513 = vpop.permute.xlu0 %512
    %514 = vrot.lane.b32.xlu0 %v504, 17
    %v515 = vpop.permute.xlu0 %514
    %516 = vrot.lane.b32.xlu0 %v505, 17
    %v517 = vpop.permute.xlu0 %516
    %v518 = vsel %vm97, %v511, %v513
    %v519 = vsel %vm97, %v513, %v515
    %v520 = vsel %vm97, %v515, %v517
    %v526 = vmul.f32 %v496, %v511
    %v527 = vmul.f32 %v497, %v518
    %v528 = vmul.f32 %v498, %v519
    %v529 = vmul.f32 %v499, %v520
    %v530 = vmul.f32 %v500, %v517
    %536 = vrot.lane.b32.xlu0 %v526, 111
    %v537 = vpop.permute.xlu0 %536
    %538 = vrot.lane.b32.xlu0 %v527, 111
    %v539 = vpop.permute.xlu0 %538
    %540 = vrot.lane.b32.xlu0 %v528, 111
    %v541 = vpop.permute.xlu0 %540
    %542 = vrot.lane.b32.xlu0 %v529, 111
    %v543 = vpop.permute.xlu0 %542
    %544 = vrot.lane.b32.xlu0 %v530, 111
    %v545 = vpop.permute.xlu0 %544
    %v546 = vsel %vm68, %v537, %v539
    %v547 = vsel %vm68, %v539, %v541
    %v548 = vsel %vm68, %v541, %v543
    %v549 = vsel %vm68, %v543, %v545
    %554 = vst [vmem:[#allocation2 + $0x100] sm:$0xff] %v546
    %555 = vst [vmem:[#allocation2 + $0x108] sm:$0xff] %v547
    %556 = vst [vmem:[#allocation2 + $0x110] sm:$0xff] %v548
    %557 = vst [vmem:[#allocation2 + $0x118] sm:$0xff] %v549
    %v558 = vld [vmem:[%s1] sm:$0xff]
    %v559 = vld [vmem:[#allocation2] sm:$0xff]
    %v560 = vld [vmem:[#allocation2 + $0x8] sm:$0xff]
    %v561 = vld [vmem:[#allocation2 + $0x10] sm:$0xff]
    %v562 = vld [vmem:[#allocation2 + $0x18] sm:$0xff]
    %v563 = vld [vmem:[#allocation2 + $0x20] sm:$0xff]
    %v564 = vld [vmem:[#allocation2 + $0x28] sm:$0xff]
    %v565 = vld [vmem:[#allocation2 + $0x30] sm:$0xff]
    %v566 = vld [vmem:[#allocation2 + $0x38] sm:$0xff]
    %v567 = vld [vmem:[#allocation2 + $0x40] sm:$0xff]
    %v568 = vld [vmem:[#allocation2 + $0x48] sm:$0xff]
    %v569 = vld [vmem:[#allocation2 + $0x50] sm:$0xff]
    %v570 = vld [vmem:[#allocation2 + $0x58] sm:$0xff]
    %v571 = vld [vmem:[#allocation2 + $0x60] sm:$0xff]
    %v572 = vld [vmem:[#allocation2 + $0x68] sm:$0xff]
    %v573 = vld [vmem:[#allocation2 + $0x70] sm:$0xff]
    %v574 = vld [vmem:[#allocation2 + $0x78] sm:$0xff]
    %v575 = vld [vmem:[#allocation2 + $0x80] sm:$0xff]
    %v576 = vld [vmem:[#allocation2 + $0x88] sm:$0xff]
    %v577 = vld [vmem:[#allocation2 + $0x90] sm:$0xff]
    %v578 = vld [vmem:[#allocation2 + $0x98] sm:$0xff]
    %v579 = vld [vmem:[#allocation2 + $0xa0] sm:$0xff]
    %v580 = vld [vmem:[#allocation2 + $0xa8] sm:$0xff]
    %v581 = vld [vmem:[#allocation2 + $0xb0] sm:$0xff]
    %v582 = vld [vmem:[#allocation2 + $0xb8] sm:$0xff]
    %v583 = vld [vmem:[#allocation2 + $0xc0] sm:$0xff]
    %v584 = vld [vmem:[#allocation2 + $0xc8] sm:$0xff]
    %v585 = vld [vmem:[#allocation2 + $0xd0] sm:$0xff]
    %v586 = vld [vmem:[#allocation2 + $0xd8] sm:$0xff]
    %v587 = vld [vmem:[#allocation2 + $0xe0] sm:$0xff]
    %v588 = vld [vmem:[#allocation2 + $0xe8] sm:$0xff]
    %v589 = vld [vmem:[#allocation2 + $0xf0] sm:$0xff]
    %v590 = vld [vmem:[#allocation2 + $0xf8] sm:$0xff]
    %v591 = vld [vmem:[#allocation2 + $0x100] sm:$0xff]
    %v592 = vld [vmem:[#allocation2 + $0x108] sm:$0xff]
    %v593 = vld [vmem:[#allocation2 + $0x110] sm:$0xff]
    %v594 = vld [vmem:[#allocation2 + $0x118] sm:$0xff]
    %vm595 = vcmask 588800
    %v597 = vsel %vm595, %v558, 0
    %599 = vmatprep.subr.mxu0 0.0
    %600 = vmatpush1.msra.mxu0 0.0
    %601 = vmatprep.subr.mxu0 0.0
    %602 = vmatpush1.msra.mxu0 0.0
    %603 = vmatprep.subr.mxu0 0.0
    %604 = vmatpush1.msra.mxu0 0.0
    %605 = vmatprep.subr.mxu0 0.0
    %606 = vmatpush1.msra.mxu0 0.0
    %607 = vmatprep.subr.mxu0 0.0
    %608 = vmatpush1.msra.mxu0 0.0
    %609 = vmatprep.subr.mxu0 0.0
    %610 = vmatpush1.msra.mxu0 0.0
    %611 = vmatprep.subr.mxu0 0.0
    %612 = vmatpush1.msra.mxu0 0.0
    %613 = vmatprep.subr.mxu0 %v592
    %614 = vmatpush1.msra.mxu0 %v591
    %615 = vmatprep.subr.mxu0 %v588
    %616 = vmatpush1.msra.mxu0 %v587
    %617 = vmatprep.subr.mxu0 %v584
    %618 = vmatpush1.msra.mxu0 %v583
    %619 = vmatprep.subr.mxu0 %v580
    %620 = vmatpush1.msra.mxu0 %v579
    %621 = vmatprep.subr.mxu0 %v576
    %622 = vmatpush1.msra.mxu0 %v575
    %623 = vmatprep.subr.mxu0 %v572
    %624 = vmatpush1.msra.mxu0 %v571
    %625 = vmatprep.subr.mxu0 %v568
    %626 = vmatpush1.msra.mxu0 %v567
    %627 = vmatprep.subr.mxu0 %v564
    %628 = vmatpush1.msra.mxu0 %v563
    %629 = vmatprep.subr.mxu0 %v560
    %630 = vmatpush1.msra.mxu0 %v559
    %631 = vmatprep.subr.mxu0 0.0
    %632 = vmatpush2.msra.mxu0 0.0
    %633 = vmatprep.subr.mxu0 0.0
    %634 = vmatpush2.msra.mxu0 0.0
    %635 = vmatprep.subr.mxu0 0.0
    %636 = vmatpush2.msra.mxu0 0.0
    %637 = vmatprep.subr.mxu0 0.0
    %638 = vmatpush2.msra.mxu0 0.0
    %639 = vmatprep.subr.mxu0 0.0
    %640 = vmatpush2.msra.mxu0 0.0
    %641 = vmatprep.subr.mxu0 0.0
    %642 = vmatpush2.msra.mxu0 0.0
    %643 = vmatprep.subr.mxu0 0.0
    %644 = vmatpush2.msra.mxu0 0.0
    %645 = vmatprep.subr.mxu0 0.0
    %646 = vmatpush2.msra.mxu0 0.0
    %647 = vmatprep.subr.mxu0 0.0
    %648 = vmatpush2.msra.mxu0 0.0
    %649 = vmatprep.subr.mxu0 0.0
    %650 = vmatpush2.msra.mxu0 0.0
    %651 = vmatprep.subr.mxu0 0.0
    %652 = vmatpush2.msra.mxu0 0.0
    %653 = vmatprep.subr.mxu0 0.0
    %654 = vmatpush2.msra.mxu0 0.0
    %655 = vmatprep.subr.mxu0 0.0
    %656 = vmatpush2.msra.mxu0 0.0
    %657 = vmatprep.subr.mxu0 0.0
    %658 = vmatpush2.msra.mxu0 0.0
    %659 = vmatprep.subr.mxu0 0.0
    %660 = vmatpush2.msra.mxu0 0.0
    %661 = vmatprep.subr.mxu0 0.0
    %662 = vmatpush2.msra.mxu0 0.0
    %663 = vmatprep.mubr.f32.mxu0 0.0
    %664 = vmatmul.mubr.f32.gmra.mxu0 %v597
    %v665 = vpop.f32.mrf.mxu0
    %v666 = vadd.f32 0.0, %v665
    %v667 = vpop.f32.mrf.mxu0
    %v668 = vadd.f32 0.0, %v667
    %669 = vdwg.mxu0
    %670 = vmatprep.subr.mxu0 0.0
    %671 = vmatpush1.msra.mxu0 0.0
    %672 = vmatprep.subr.mxu0 0.0
    %673 = vmatpush1.msra.mxu0 0.0
    %674 = vmatprep.subr.mxu0 0.0
    %675 = vmatpush1.msra.mxu0 0.0
    %676 = vmatprep.subr.mxu0 0.0
    %677 = vmatpush1.msra.mxu0 0.0
    %678 = vmatprep.subr.mxu0 0.0
    %679 = vmatpush1.msra.mxu0 0.0
    %680 = vmatprep.subr.mxu0 0.0
    %681 = vmatpush1.msra.mxu0 0.0
    %682 = vmatprep.subr.mxu0 0.0
    %683 = vmatpush1.msra.mxu0 0.0
    %684 = vmatprep.subr.mxu0 %v594
    %685 = vmatpush1.msra.mxu0 %v593
    %686 = vmatprep.subr.mxu0 %v590
    %687 = vmatpush1.msra.mxu0 %v589
    %688 = vmatprep.subr.mxu0 %v586
    %689 = vmatpush1.msra.mxu0 %v585
    %690 = vmatprep.subr.mxu0 %v582
    %691 = vmatpush1.msra.mxu0 %v581
    %692 = vmatprep.subr.mxu0 %v578
    %693 = vmatpush1.msra.mxu0 %v577
    %694 = vmatprep.subr.mxu0 %v574
    %695 = vmatpush1.msra.mxu0 %v573
    %696 = vmatprep.subr.mxu0 %v570
    %697 = vmatpush1.msra.mxu0 %v569
    %698 = vmatprep.subr.mxu0 %v566
    %699 = vmatpush1.msra.mxu0 %v565
    %700 = vmatprep.subr.mxu0 %v562
    %701 = vmatpush1.msra.mxu0 %v561
    %702 = vmatprep.subr.mxu0 0.0
    %703 = vmatpush2.msra.mxu0 0.0
    %704 = vmatprep.subr.mxu0 0.0
    %705 = vmatpush2.msra.mxu0 0.0
    %706 = vmatprep.subr.mxu0 0.0
    %707 = vmatpush2.msra.mxu0 0.0
    %708 = vmatprep.subr.mxu0 0.0
    %709 = vmatpush2.msra.mxu0 0.0
    %710 = vmatprep.subr.mxu0 0.0
    %711 = vmatpush2.msra.mxu0 0.0
    %712 = vmatprep.subr.mxu0 0.0
    %713 = vmatpush2.msra.mxu0 0.0
    %714 = vmatprep.subr.mxu0 0.0
    %715 = vmatpush2.msra.mxu0 0.0
    %716 = vmatprep.subr.mxu0 0.0
    %717 = vmatpush2.msra.mxu0 0.0
    %718 = vmatprep.subr.mxu0 0.0
    %719 = vmatpush2.msra.mxu0 0.0
    %720 = vmatprep.subr.mxu0 0.0
    %721 = vmatpush2.msra.mxu0 0.0
    %722 = vmatprep.subr.mxu0 0.0
    %723 = vmatpush2.msra.mxu0 0.0
    %724 = vmatprep.subr.mxu0 0.0
    %725 = vmatpush2.msra.mxu0 0.0
    %726 = vmatprep.subr.mxu0 0.0
    %727 = vmatpush2.msra.mxu0 0.0
    %728 = vmatprep.subr.mxu0 0.0
    %729 = vmatpush2.msra.mxu0 0.0
    %730 = vmatprep.subr.mxu0 0.0
    %731 = vmatpush2.msra.mxu0 0.0
    %732 = vmatprep.subr.mxu0 0.0
    %733 = vmatpush2.msra.mxu0 0.0
    %734 = vmatprep.mubr.f32.mxu0 0.0
    %735 = vmatmul.mubr.f32.gmra.mxu0 %v597
    %v736 = vpop.f32.mrf.mxu0
    %v737 = vadd.f32 0.0, %v736
    %v738 = vpop.f32.mrf.mxu0
    %v739 = vadd.f32 0.0, %v738
    %740 = vdwg.mxu0
    %v741 = vadd.f32 %v666, %v668
    %v742 = vadd.f32 %v741, %v737
    %v743 = vadd.f32 %v742, %v739
    %744 = vadd.xlane.f32.xlu0 %v743
    %v745 = vpop.xlane.xlu0 %744
    %v746 = vmul.f32 %v745, 0.001953125
    %v747 = vsub.f32 %v666, %v746
    %v748 = vsub.f32 %v668, %v746
    %v749 = vsub.f32 %v737, %v746
    %v750 = vsub.f32 %v739, %v746
    %v751 = vmul.f32 %v747, %v747
    %v752 = vmul.f32 %v748, %v748
    %v753 = vmul.f32 %v749, %v749
    %v754 = vmul.f32 %v750, %v750
    %v755 = vadd.f32 %v751, %v752
    %v756 = vadd.f32 %v755, %v753
    %v757 = vadd.f32 %v756, %v754
    %758 = vadd.xlane.f32.xlu0 %v757
    %v759 = vpop.xlane.xlu0 %758
    %v760 = vmul.f32 %v759, 0.001953125
    %v761 = vld [vmem:[%s3] sm:$0xff]
    %v762 = vadd.f32 %v760, 1e-05
    %v763 = vrsqrt.pop %v762
    %v764 = vmul.f32 %v761, %v763
    %766 = vset.pattern.permute.xlu0 0
    %767 = vperm.xlu0 %766, %v764
    %v768 = vpop.permute.xlu0 %767
    %v770 = vmul.f32 %v747, %v768
    %v771 = vmul.f32 %v748, %v768
    %v772 = vmul.f32 %v749, %v768
    %v773 = vmul.f32 %v750, %v768
    %v774 = vld [vmem:[%s4] sm:$0xff]
    %776 = vset.pattern.permute.xlu0 0
    %777 = vperm.xlu0 %776, %v774
    %v778 = vpop.permute.xlu0 %777
    %v780 = vadd.f32 %v770, %v778
    %v781 = vadd.f32 %v771, %v778
    %v782 = vadd.f32 %v772, %v778
    %v783 = vadd.f32 %v773, %v778
    %v784 = vxor.u32 %v780, 2147483648
    %v785 = vxor.u32 %v781, 2147483648
    %v786 = vxor.u32 %v782, 2147483648
    %v787 = vxor.u32 %v783, 2147483648
    %v788 = vmul.f32 %v784, 1.442695
    %v789 = vpow.pop %v788
    %v790 = vmul.f32 %v785, 1.442695
    %v791 = vpow.pop %v790
    %v792 = vmul.f32 %v786, 1.442695
    %v793 = vpow.pop %v792
    %v794 = vmul.f32 %v787, 1.442695
    %v795 = vpow.pop %v794
    %v796 = vadd.f32 %v789, 1.0
    %v797 = vadd.f32 %v791, 1.0
    %v798 = vadd.f32 %v793, 1.0
    %v799 = vadd.f32 %v795, 1.0
    %v800 = vrcp.pop %v796
    %v801 = vmul.f32 1.0, %v800
    %v802 = vrcp.pop %v797
    %v803 = vmul.f32 1.0, %v802
    %v804 = vrcp.pop %v798
    %v805 = vmul.f32 1.0, %v804
    %v806 = vrcp.pop %v799
    %v807 = vmul.f32 1.0, %v806
    %v808 = vmul.f32 %v780, %v801
    %v809 = vmul.f32 %v781, %v803
    %v810 = vmul.f32 %v782, %v805
    %v811 = vmul.f32 %v783, %v807
    %812 = vst [vmem:[#allocation8] sm:$0xff] %v808
    %813 = vst [vmem:[#allocation8 + $0x8] sm:$0xff] %v809
    %s814 = scalar_lea.vmem [#allocation8], 16
    %815 = vst [vmem:[%s814] sm:$0xff] %v810
    %816 = vst [vmem:[%s814 + $0x8] sm:$0xff] %v811
    // Predicated region
    $region30: #{tpu_custom_call.1} parent=1 // pred_check
      _
    $region31: #{tpu_custom_call.1} parent=1 // pred_check_branch
      %818 = sbr.rel (0) target = $region33
    $region32: #{tpu_custom_call.1} parent=1 // pred_region
      %s820 = ssub.s32 512, 512
      %821 = vsyncadd [#allocation5], %s820
      %s822 = sshll.u32 [#allocation8], 4
      %s823 = int_to_ptr.vmem [resolvable:$true] %s822
      %828 = dma.vmem_to_hbm [thread:$0]  %s823, 512, %s5, [#allocation5], 256, 256, 16
    $region33: #{tpu_custom_call.1} parent=1 // pred_fallthru
      _
    // Predicated region
    $region34: #{tpu_custom_call.1} parent=1 // pred_check
      _
    $region35: #{tpu_custom_call.1} parent=1 // pred_check_branch
      %830 = sbr.rel (0) target = $region37
    $region36: #{tpu_custom_call.1} parent=1 // pred_region
      %831 = dma.done [#allocation5], 512
    $region37: #{tpu_custom_call.1} parent=1 // pred_fallthru
      _
    %832 = vsyncpa [#allocation4], 1
    %833 = vsyncpa [#allocation7], 1
    %834 = vsyncpa [#allocation5], 1

</llo_original>
